<compile_context>
chip_gen: v7x
topology: tpu7x:2x2x1
jax: 0.10.0
libtpu: 0.0.40
codegen_flags: <defaults>
</compile_context>

<pallas_src>
import functools

import jax
import jax.numpy as jnp
import numpy as np
from jax.experimental import pallas as pl
from jax.experimental.pallas import tpu as pltpu

EPS = 1e-5


# --------------------------------------------------------------------------
# Packed parameter-slab layout (all row offsets 8-aligned for clean slicing).
# --------------------------------------------------------------------------
def _slab_layout(C1, C_, C2, P):
    r8 = lambda n: ((n + 7) // 8) * 8
    PC1, PC_, PC2 = P * C1, P * C_, P * C2
    off_w1 = 0                      # (PC1, PC_)  cv1 weight (layout folded in)
    off_w2 = off_w1 + r8(PC1)       # (PC_, C2)   cv2 3x3 VALID weight
    off_m1 = off_w2 + r8(PC_)       # (PC_, PC_)  per-channel spatial-sum matrix
    off_r2 = off_m1 + r8(PC_)       # (C2, PC2)   residual replication matrix
    off_bn = off_r2 + r8(C2)        # 4 rows: g1_tiled, b1_tiled, g2, b2
    rows = off_bn + 8
    lanes = max(PC_, PC2, C2)
    return off_w1, off_w2, off_m1, off_r2, off_bn, rows, lanes


def prepare_params(w1, g1, b1, w2, g2, b2):
    """One-time packing of every parameter into a single f32 slab (hoisted
    out of the per-call hot path)."""
    w1 = np.asarray(w1, np.float32)          # (C_, C1, 1, 1)
    w2 = np.asarray(w2, np.float32)          # (C2, C_, kh, kw)
    g1 = np.asarray(g1, np.float32); b1 = np.asarray(b1, np.float32)
    g2 = np.asarray(g2, np.float32); b2 = np.asarray(b2, np.float32)
    C_, C1 = w1.shape[0], w1.shape[1]
    C2, _, kh, kw = w2.shape
    P = kh * kw
    PC1, PC_, PC2 = P * C1, P * C_, P * C2
    off_w1, off_w2, off_m1, off_r2, off_bn, rows, lanes = _slab_layout(C1, C_, C2, P)

    # cv1 (1x1 conv) + "NCHW-flat -> channels-last-flat" layout change folded
    # into one block-structured matrix:
    #   y1[n, p*C_ + j] = sum_c x[n, c*P + p] * w1[j, c]
    w1_eff = np.zeros((C1, P, P, C_), np.float32)
    for p in range(P):
        w1_eff[:, p, p, :] = w1[:, :, 0, 0].T            # (C1, C_)
    w1_eff = w1_eff.reshape(PC1, PC_)

    # cv2: 3x3 VALID conv on a 3x3 channels-last patch == a single matmul,
    # row index = (kh*3 + kw)*C_ + j.
    w2_eff = np.transpose(w2, (2, 3, 1, 0)).reshape(PC_, C2)

    # BN1 per-channel sum over the P spatial positions, done on the MXU:
    #   (v @ m1)[p*C_ + j] = sum_{p'} v[p'*C_ + j]
    m1 = np.tile(np.eye(C_, dtype=np.float32), (P, P))

    # Residual replication: (a2 @ r2)[n, c*P + p] = a2[n, c]
    r2 = np.zeros((C2, PC2), np.float32)
    for c in range(C2):
        r2[c, c * P:(c + 1) * P] = 1.0

    slab = np.zeros((rows, lanes), np.float32)
    slab[off_w1:off_w1 + PC1, :PC_] = w1_eff
    slab[off_w2:off_w2 + PC_, :C2] = w2_eff
    slab[off_m1:off_m1 + PC_, :PC_] = m1
    slab[off_r2:off_r2 + C2, :PC2] = r2
    slab[off_bn + 0, :PC_] = np.tile(g1, P)   # gamma1, tiled to a1's lane layout
    slab[off_bn + 1, :PC_] = np.tile(b1, P)   # beta1
    slab[off_bn + 2, :C2] = g2
    slab[off_bn + 3, :C2] = b2
    return jnp.asarray(slab)


# --------------------------------------------------------------------------
# Fused kernel.
# --------------------------------------------------------------------------
def bottleneck_kernel(x_ref, p_ref, o_ref, *, P, C1, C_, C2,
                      off_w1, off_w2, off_m1, off_r2, off_bn):
    # x_ref : (N, C1*P)  channels-first-flattened (== bitcast of NCHW)
    # p_ref : packed parameter slab (see _slab_layout)
    # o_ref : (N, C2*P)  same flattened-NCHW layout as x
    N = x_ref.shape[0]
    PC1, PC_, PC2 = P * C1, P * C_, P * C2
    inv_np = 1.0 / float(N * P)

    x = x_ref[...]                                                    # (N, PC1)

    # ---- cv1: 1x1 conv + layout change as one block-structured matmul ----
    w1 = p_ref[off_w1:off_w1 + PC1, 0:PC_]                            # (PC1, PC_)
    y1 = jnp.dot(x, w1, preferred_element_type=jnp.float32)           # (N, PC_)

    # ---- BN1 (training mode: batch stats over N*H*W, biased var, two-pass) ----
    m1 = p_ref[off_m1:off_m1 + PC_, 0:PC_]                            # (PC_, PC_)
    mu1 = jnp.dot(jnp.sum(y1, axis=0, keepdims=True), m1,
                  preferred_element_type=jnp.float32) * inv_np        # (1, PC_)
    d1 = y1 - mu1
    var1 = jnp.dot(jnp.sum(d1 * d1, axis=0, keepdims=True), m1,
                   preferred_element_type=jnp.float32) * inv_np       # (1, PC_)
    g1 = p_ref[off_bn + 0:off_bn + 1, 0:PC_]
    b1 = p_ref[off_bn + 1:off_bn + 2, 0:PC_]
    z1 = d1 * (g1 * jax.lax.rsqrt(var1 + EPS)) + b1
    a1 = z1 * jax.nn.sigmoid(z1)                                      # SiLU (EUP)

    # ---- cv2: 3x3 VALID conv on a 3x3 input == one (N, PC_)@(PC_, C2) dot ----
    w2 = p_ref[off_w2:off_w2 + PC_, 0:C2]                             # (PC_, C2)
    y2 = jnp.dot(a1, w2, preferred_element_type=jnp.float32)          # (N, C2)

    # ---- BN2: batch stats over N only (spatial output is 1x1), two-pass ----
    mu2 = jnp.mean(y2, axis=0, keepdims=True)                         # (1, C2)
    d2 = y2 - mu2
    var2 = jnp.mean(d2 * d2, axis=0, keepdims=True)
    g2 = p_ref[off_bn + 2:off_bn + 3, 0:C2]
    b2 = p_ref[off_bn + 3:off_bn + 4, 0:C2]
    z2 = d2 * (g2 * jax.lax.rsqrt(var2 + EPS)) + b2
    a2 = z2 * jax.nn.sigmoid(z2)                                      # (N, C2)

    # ---- residual: per-sample (N,C,1,1) branch broadcast over 3x3 spatial ----
    # Broadcast done on the idle MXU via a 0/1 replication matrix (no tiling).
    r2 = p_ref[off_r2:off_r2 + C2, 0:PC2]                             # (C2, PC2)
    o_ref[...] = x + jnp.dot(a2, r2, preferred_element_type=jnp.float32)


# --------------------------------------------------------------------------
# Wrapper (layout-stable: only bitcast reshapes on either side of the call).
# --------------------------------------------------------------------------
def make_bottleneck_forward(c1, c2, k=3):
    c_ = int(c2 * 0.5)
    P = k * k
    off_w1, off_w2, off_m1, off_r2, off_bn, rows, lanes = _slab_layout(c1, c_, c2, P)
    kernel = functools.partial(
        bottleneck_kernel, P=P, C1=c1, C_=c_, C2=c2,
        off_w1=off_w1, off_w2=off_w2, off_m1=off_m1, off_r2=off_r2, off_bn=off_bn)

    @jax.jit
    def forward(x_nchw, params):
        N, C1x, H, W = x_nchw.shape
        assert C1x == c1 and (H, W) == (k, k), \
            "cv2 has padding=0: residual broadcast requires k x k input"
        assert c1 == c2, "residual add requires c1 == c2"
        assert params.shape == (rows, lanes)

        x_flat = x_nchw.reshape(N, c1 * P)          # bitcast, no transpose
        flops = (2 * N * (c1 * P) * (P * c_)        # cv1
                 + 2 * N * (P * c_) * c2            # cv2
                 + 2 * 2 * (P * c_) * (P * c_)      # BN1 spatial-sum matmuls
                 + 2 * N * c2 * (P * c2))           # residual replication
        cost = pl.CostEstimate(
            flops=flops,
            transcendentals=N * P * c_ + N * c2 + P * c_ + c2,
            bytes_accessed=4 * (x_flat.size + params.size + N * P * c2))
        vmem = pl.BlockSpec(memory_space=pltpu.MemorySpace.VMEM)
        out_flat = pl.pallas_call(
            kernel,
            out_shape=jax.ShapeDtypeStruct((N, P * c2), jnp.float32),
            in_specs=[vmem, vmem],
            out_specs=vmem,
            compiler_params=pltpu.CompilerParams(
                allow_input_fusion=[True, False]),
            cost_estimate=cost,
        )(x_flat, params)
        return out_flat.reshape(N, c2, k, k)        # bitcast back to NCHW

    return forward


# --------------------------------------------------------------------------
# Pure-JAX NCHW reference mirroring the PyTorch module in training mode.
# --------------------------------------------------------------------------
def reference(x, w1, g1, b1, w2, g2, b2):
    def conv(x, w):
        return jax.lax.conv_general_dilated(
            x, w, window_strides=(1, 1), padding="VALID",
            dimension_numbers=("NCHW", "OIHW", "NCHW"))

    def bn_silu(y, g, b):
        mu = y.mean(axis=(0, 2, 3), keepdims=True)
        var = y.var(axis=(0, 2, 3), keepdims=True)        # biased, like BN training
        y = (y - mu) / jnp.sqrt(var + EPS) * g.reshape(1, -1, 1, 1) + b.reshape(1, -1, 1, 1)
        return y * jax.nn.sigmoid(y)

    a1 = bn_silu(conv(x, w1), g1, b1)
    a2 = bn_silu(conv(a1, w2), g2, b2)                    # (N, C2, 1, 1)
    return x + a2                                         # broadcasts over 3x3


if __name__ == "__main__":
    key = jax.random.PRNGKey(0)
    N, C1, H, W = 2, 8, 3, 3        # Bottleneck(c1=8, c2=8); spatial must be 3x3
    C2 = C1
    C_ = int(C2 * 0.5)

    kx, k1, k2 = jax.random.split(key, 3)
    x = jax.random.normal(kx, (N, C1, H, W), jnp.float32)
    # deterministic synthetic parameters (shapes per module __init__; fresh
    # BatchNorm2d has weight=1, bias=0 and runs in training mode)
    w1 = jax.random.normal(k1, (C_, C1, 1, 1), jnp.float32) * 0.3   # cv1.conv.weight
    w2 = jax.random.normal(k2, (C2, C_, 3, 3), jnp.float32) * 0.2   # cv2.conv.weight
    g1 = jnp.ones((C_,), jnp.float32)                               # cv1.bn.weight
    b1 = jnp.zeros((C_,), jnp.float32)                              # cv1.bn.bias
    g2 = jnp.ones((C2,), jnp.float32)                               # cv2.bn.weight
    b2 = jnp.zeros((C2,), jnp.float32)                              # cv2.bn.bias

    params = prepare_params(w1, g1, b1, w2, g2, b2)   # one-time prep, hoisted
    forward = make_bottleneck_forward(C1, C2)

    out = jax.block_until_ready(forward(x, params))

    ref = reference(x, w1, g1, b1, w2, g2, b2)
    assert out.shape == ref.shape == (N, C2, H, W)
    np.testing.assert_allclose(np.asarray(out), np.asarray(ref), atol=1e-3, rtol=1e-3)
    print("KERNEL_OK")
</pallas_src>

<mosaic_0001>
module attributes {stable_mosaic.version = 11 : i64} {
  func.func @bottleneck_kernel(%arg0: memref<2x72xf32, #tpu.memory_space<vmem>>, %arg1: memref<168x72xf32, #tpu.memory_space<vmem>>, %arg2: memref<2x72xf32, #tpu.memory_space<vmem>>) attributes {dimension_semantics = [], scalar_prefetch = 0 : i64, scratch_operands = 0 : i64, tpu.core_type = #tpu.core_type<tc>} {
    %c0 = arith.constant 0 : index
    %c0_0 = arith.constant 0 : index
    %0 = vector.load %arg0[%c0, %c0_0] : memref<2x72xf32, #tpu.memory_space<vmem>>, vector<2x72xf32>
    %c0_1 = arith.constant 0 : index
    %c0_2 = arith.constant 0 : index
    %1 = vector.load %arg1[%c0_1, %c0_2] : memref<168x72xf32, #tpu.memory_space<vmem>>, vector<72x36xf32>
    %cst = arith.constant dense<0.000000e+00> : vector<2x36xf32>
    %2 = tpu.matmul %0, %1, %cst {dimension_numbers = #tpu.dot_dimension_numbers<[1], [0], [0], [1], [0, 0, 1, 1], [], []>} : vector<2x72xf32>, vector<72x36xf32>, vector<2x36xf32> -> vector<2x36xf32>
    %c112 = arith.constant 112 : index
    %c0_3 = arith.constant 0 : index
    %3 = vector.load %arg1[%c112, %c0_3] : memref<168x72xf32, #tpu.memory_space<vmem>>, vector<36x36xf32>
    %cst_4 = arith.constant dense<0.000000e+00> : vector<36xf32>
    %4 = vector.multi_reduction <add>, %2, %cst_4 [0] : vector<2x36xf32> to vector<36xf32>
    %5 = vector.shape_cast %4 : vector<36xf32> to vector<1x36xf32>
    %cst_5 = arith.constant dense<0.000000e+00> : vector<1x36xf32>
    %6 = tpu.matmul %5, %3, %cst_5 {dimension_numbers = #tpu.dot_dimension_numbers<[1], [0], [0], [1], [0, 0, 1, 1], [], []>} : vector<1x36xf32>, vector<36x36xf32>, vector<1x36xf32> -> vector<1x36xf32>
    %cst_6 = arith.constant 0.055555556 : f32
    %7 = vector.broadcast %cst_6 : f32 to vector<1x36xf32>
    %8 = arith.mulf %6, %7 : vector<1x36xf32>
    %9 = vector.broadcast %8 : vector<1x36xf32> to vector<2x36xf32>
    %10 = arith.subf %2, %9 : vector<2x36xf32>
    %11 = arith.mulf %10, %10 : vector<2x36xf32>
    %cst_7 = arith.constant dense<0.000000e+00> : vector<36xf32>
    %12 = vector.multi_reduction <add>, %11, %cst_7 [0] : vector<2x36xf32> to vector<36xf32>
    %13 = vector.shape_cast %12 : vector<36xf32> to vector<1x36xf32>
    %cst_8 = arith.constant dense<0.000000e+00> : vector<1x36xf32>
    %14 = tpu.matmul %13, %3, %cst_8 {dimension_numbers = #tpu.dot_dimension_numbers<[1], [0], [0], [1], [0, 0, 1, 1], [], []>} : vector<1x36xf32>, vector<36x36xf32>, vector<1x36xf32> -> vector<1x36xf32>
    %cst_9 = arith.constant 0.055555556 : f32
    %15 = vector.broadcast %cst_9 : f32 to vector<1x36xf32>
    %16 = arith.mulf %14, %15 : vector<1x36xf32>
    %c160 = arith.constant 160 : index
    %c0_10 = arith.constant 0 : index
    %17 = vector.load %arg1[%c160, %c0_10] : memref<168x72xf32, #tpu.memory_space<vmem>>, vector<1x36xf32>
    %c161 = arith.constant 161 : index
    %c0_11 = arith.constant 0 : index
    %18 = vector.load %arg1[%c161, %c0_11] : memref<168x72xf32, #tpu.memory_space<vmem>>, vector<1x36xf32>
    %cst_12 = arith.constant 9.99999974E-6 : f32
    %19 = vector.broadcast %cst_12 : f32 to vector<1x36xf32>
    %20 = arith.addf %16, %19 : vector<1x36xf32>
    %21 = math.rsqrt %20 : vector<1x36xf32>
    %22 = arith.mulf %17, %21 : vector<1x36xf32>
    %23 = vector.broadcast %22 : vector<1x36xf32> to vector<2x36xf32>
    %24 = arith.mulf %10, %23 : vector<2x36xf32>
    %25 = vector.broadcast %18 : vector<1x36xf32> to vector<2x36xf32>
    %26 = arith.addf %24, %25 : vector<2x36xf32>
    %27 = arith.negf %26 : vector<2x36xf32>
    %28 = math.exp %27 : vector<2x36xf32>
    %cst_13 = arith.constant 1.000000e+00 : f32
    %29 = vector.broadcast %cst_13 : f32 to vector<2x36xf32>
    %30 = arith.addf %29, %28 : vector<2x36xf32>
    %31 = arith.divf %29, %30 : vector<2x36xf32>
    %32 = arith.mulf %26, %31 : vector<2x36xf32>
    %c72 = arith.constant 72 : index
    %c0_14 = arith.constant 0 : index
    %33 = vector.load %arg1[%c72, %c0_14] : memref<168x72xf32, #tpu.memory_space<vmem>>, vector<36x8xf32>
    %cst_15 = arith.constant dense<0.000000e+00> : vector<2x8xf32>
    %34 = tpu.matmul %32, %33, %cst_15 {dimension_numbers = #tpu.dot_dimension_numbers<[1], [0], [0], [1], [0, 0, 1, 1], [], []>} : vector<2x36xf32>, vector<36x8xf32>, vector<2x8xf32> -> vector<2x8xf32>
    %cst_16 = arith.constant dense<0.000000e+00> : vector<8xf32>
    %35 = vector.multi_reduction <add>, %34, %cst_16 [0] : vector<2x8xf32> to vector<8xf32>
    %36 = vector.shape_cast %35 : vector<8xf32> to vector<1x8xf32>
    %cst_17 = arith.constant 2.000000e+00 : f32
    %37 = vector.broadcast %cst_17 : f32 to vector<1x8xf32>
    %38 = arith.divf %36, %37 : vector<1x8xf32>
    %39 = vector.broadcast %38 : vector<1x8xf32> to vector<2x8xf32>
    %40 = arith.subf %34, %39 : vector<2x8xf32>
    %41 = arith.mulf %40, %40 : vector<2x8xf32>
    %cst_18 = arith.constant dense<0.000000e+00> : vector<8xf32>
    %42 = vector.multi_reduction <add>, %41, %cst_18 [0] : vector<2x8xf32> to vector<8xf32>
    %43 = vector.shape_cast %42 : vector<8xf32> to vector<1x8xf32>
    %cst_19 = arith.constant 2.000000e+00 : f32
    %44 = vector.broadcast %cst_19 : f32 to vector<1x8xf32>
    %45 = arith.divf %43, %44 : vector<1x8xf32>
    %c162 = arith.constant 162 : index
    %c0_20 = arith.constant 0 : index
    %46 = vector.load %arg1[%c162, %c0_20] : memref<168x72xf32, #tpu.memory_space<vmem>>, vector<1x8xf32>
    %c163 = arith.constant 163 : index
    %c0_21 = arith.constant 0 : index
    %47 = vector.load %arg1[%c163, %c0_21] : memref<168x72xf32, #tpu.memory_space<vmem>>, vector<1x8xf32>
    %cst_22 = arith.constant 9.99999974E-6 : f32
    %48 = vector.broadcast %cst_22 : f32 to vector<1x8xf32>
    %49 = arith.addf %45, %48 : vector<1x8xf32>
    %50 = math.rsqrt %49 : vector<1x8xf32>
    %51 = arith.mulf %46, %50 : vector<1x8xf32>
    %52 = vector.broadcast %51 : vector<1x8xf32> to vector<2x8xf32>
    %53 = arith.mulf %40, %52 : vector<2x8xf32>
    %54 = vector.broadcast %47 : vector<1x8xf32> to vector<2x8xf32>
    %55 = arith.addf %53, %54 : vector<2x8xf32>
    %56 = arith.negf %55 : vector<2x8xf32>
    %57 = math.exp %56 : vector<2x8xf32>
    %cst_23 = arith.constant 1.000000e+00 : f32
    %58 = vector.broadcast %cst_23 : f32 to vector<2x8xf32>
    %59 = arith.addf %58, %57 : vector<2x8xf32>
    %60 = arith.divf %58, %59 : vector<2x8xf32>
    %61 = arith.mulf %55, %60 : vector<2x8xf32>
    %c152 = arith.constant 152 : index
    %c0_24 = arith.constant 0 : index
    %62 = vector.load %arg1[%c152, %c0_24] : memref<168x72xf32, #tpu.memory_space<vmem>>, vector<8x72xf32>
    %cst_25 = arith.constant dense<0.000000e+00> : vector<2x72xf32>
    %63 = tpu.matmul %61, %62, %cst_25 {dimension_numbers = #tpu.dot_dimension_numbers<[1], [0], [0], [1], [0, 0, 1, 1], [], []>} : vector<2x8xf32>, vector<8x72xf32>, vector<2x72xf32> -> vector<2x72xf32>
    %64 = arith.addf %0, %63 : vector<2x72xf32>
    %c0_26 = arith.constant 0 : index
    %c0_27 = arith.constant 0 : index
    %65 = vector.load %arg2[%c0_26, %c0_27] : memref<2x72xf32, #tpu.memory_space<vmem>>, vector<2x72xf32>
    tpu.vector_store %arg2[%c0_26, %c0_27], %64 {strides = array<i32>} : memref<2x72xf32, #tpu.memory_space<vmem>>, vector<2x72xf32>,
    return
  }
}

</mosaic_0001>

<llo_original>
// kernel: forward.1
$region0: #{forward.1}
  #allocation0 [shape = 'u32[]', space=smem, size = 0x4, offset = 0x4, fixed_abs, tag = 'smem constant byte address 0x4 - core index']
  #allocation1 [shape = 'u32[144,128]{1,0:T(1,128)}', space=vmem, size = 0x12000, scoped, tag = 'internal scratch']
  %s0 = inlined_call_operand.vmem [shape: f32[2,72], index: 0, kind: input, shape index: {}]
  %s1 = inlined_call_operand.vmem [shape: f32[168,72], index: 1, kind: input, shape index: {}]
  %s2 = inlined_call_operand.vmem [shape: f32[2,72], index: 2, kind: output, shape index: {}]
  %s3 = sld [smem:[#allocation0]]
  $region18: #{forward.1} parent=0
    _
  %s5 = ssub.s32 1, %s3
  %s6 = scalar_select 0, %s5, %s3
  // Predicated region
  $region2: #{forward.1} parent=0 // pred_check
    _
  $region3: #{forward.1} parent=0 // pred_check_branch
    %8 = sbr.rel (0) target = $region5
  $region4: #{forward.1} parent=0 // pred_region
    _
  $region5: #{forward.1} parent=0 // pred_fallthru
    _
  // Predicated region
  $region6: #{forward.1} parent=0 // pred_check
    _
  $region7: #{forward.1} parent=0 // pred_check_branch
    %10 = sbr.rel (0) target = $region9
  $region8: #{forward.1} parent=0 // pred_region
    _
  $region9: #{forward.1} parent=0 // pred_fallthru
    _
  %v11 = vld [vmem:[%s0] sm:$0x3]
  %v12 = vld [vmem:[%s1] sm:$0xff]
  %v13 = vld [vmem:[%s1 + $0x8] sm:$0xff]
  %v14 = vld [vmem:[%s1 + $0x10] sm:$0xff]
  %v15 = vld [vmem:[%s1 + $0x18] sm:$0xff]
  %v16 = vld [vmem:[%s1 + $0x20] sm:$0xff]
  %v17 = vld [vmem:[%s1 + $0x28] sm:$0xff]
  %v18 = vld [vmem:[%s1 + $0x30] sm:$0xff]
  %v19 = vld [vmem:[%s1 + $0x38] sm:$0xff]
  %v20 = vld [vmem:[%s1 + $0x40] sm:$0xff]
  %vm21 = vcmask 588800
  %v23 = vsel %vm21, %v11, 0
  %25 = vmatprep.subr.mxu0 0.0
  %26 = vmatpush1.msra.mxu0 %v12
  %27 = vmatprep.subr.mxu0 0.0
  %28 = vmatpush1.msra.mxu0 %v13
  %29 = vmatprep.subr.mxu0 0.0
  %30 = vmatpush1.msra.mxu0 %v14
  %31 = vmatprep.subr.mxu0 0.0
  %32 = vmatpush1.msra.mxu0 %v15
  %33 = vmatprep.subr.mxu0 0.0
  %34 = vmatpush1.msra.mxu0 %v16
  %35 = vmatprep.subr.mxu0 0.0
  %36 = vmatpush1.msra.mxu0 %v17
  %37 = vmatprep.subr.mxu0 0.0
  %38 = vmatpush1.msra.mxu0 %v18
  %39 = vmatprep.subr.mxu0 0.0
  %40 = vmatpush1.msra.mxu0 %v19
  %41 = vmatprep.subr.mxu0 0.0
  %42 = vmatpush1.msra.mxu0 %v20
  %43 = vmatprep.subr.mxu0 0.0
  %44 = vmatpush1.msra.mxu0 0.0
  %45 = vmatprep.subr.mxu0 0.0
  %46 = vmatpush1.msra.mxu0 0.0
  %47 = vmatprep.subr.mxu0 0.0
  %48 = vmatpush1.msra.mxu0 0.0
  %49 = vmatprep.subr.mxu0 0.0
  %50 = vmatpush1.msra.mxu0 0.0
  %51 = vmatprep.subr.mxu0 0.0
  %52 = vmatpush1.msra.mxu0 0.0
  %53 = vmatprep.subr.mxu0 0.0
  %54 = vmatpush1.msra.mxu0 0.0
  %55 = vmatprep.subr.mxu0 0.0
  %56 = vmatpush1.msra.mxu0 0.0
  %57 = vmatprep.subr.mxu0 0.0
  %58 = vmatpush1.msra.mxu0 0.0
  %59 = vmatprep.subr.mxu0 0.0
  %60 = vmatpush1.msra.mxu0 0.0
  %61 = vmatprep.subr.mxu0 0.0
  %62 = vmatpush1.msra.mxu0 0.0
  %63 = vmatprep.subr.mxu0 0.0
  %64 = vmatpush1.msra.mxu0 0.0
  %65 = vmatprep.subr.mxu0 0.0
  %66 = vmatpush1.msra.mxu0 0.0
  %67 = vmatprep.subr.mxu0 0.0
  %68 = vmatpush1.msra.mxu0 0.0
  %69 = vmatprep.subr.mxu0 0.0
  %70 = vmatpush1.msra.mxu0 0.0
  %71 = vmatprep.subr.mxu0 0.0
  %72 = vmatpush1.msra.mxu0 0.0
  %73 = vmatprep.subr.mxu0 0.0
  %74 = vmatpush1.msra.mxu0 0.0
  %75 = vmatprep.subr.mxu0 0.0
  %76 = vmatpush1.msra.mxu0 0.0
  %77 = vmatprep.subr.mxu0 0.0
  %78 = vmatpush1.msra.mxu0 0.0
  %79 = vmatprep.subr.mxu0 0.0
  %80 = vmatpush1.msra.mxu0 0.0
  %81 = vmatprep.subr.mxu0 0.0
  %82 = vmatpush1.msra.mxu0 0.0
  %83 = vmatprep.subr.mxu0 0.0
  %84 = vmatpush1.msra.mxu0 0.0
  %85 = vmatprep.subr.mxu0 0.0
  %86 = vmatpush1.msra.mxu0 0.0
  %87 = vmatprep.subr.mxu0 0.0
  %88 = vmatpush1.msra.mxu0 0.0
  %89 = vmatprep.mubr.f32.mxu0 0.0
  %90 = vmatmul.mubr.f32.gmra.mrb[0].mxu0 %v23
  %v91 = vpop.f32.mrb[0].mxu0
  %v92 = vadd.f32 0.0, %v91
  %v93 = vpop.f32.mrb[0].mxu0
  %94 = vdwg.mxu0
  %v95 = vld [vmem:[%s1 + $0x70] sm:$0xff]
  %v96 = vld [vmem:[%s1 + $0x78] sm:$0xff]
  %v97 = vld [vmem:[%s1 + $0x80] sm:$0xff]
  %v98 = vld [vmem:[%s1 + $0x88] sm:$0xff]
  %v99 = vld [vmem:[%s1 + $0x90] sm:$0xf]
  %vm100 = vcmask 287744
  %v101 = vsel %vm100, %v92, 0.0
  %v102 = vrot.slane %v101, 4
  %v103 = vadd.f32 %v101, %v102
  %v104 = vrot.slane %v103, 2
  %v105 = vadd.f32 %v103, %v104
  %v106 = vrot.slane %v105, 1
  %v107 = vadd.f32 %v105, %v106
  %vm108 = vcmask 293888
  %v110 = vsel %vm108, %v107, 0
  %vm112 = vcmask 1043456
  %v114 = vsel %vm112, %v99, 0
  %116 = vmatprep.subr.mxu0 0.0
  %117 = vmatpush1.msra.mxu0 %v95
  %118 = vmatprep.subr.mxu0 0.0
  %119 = vmatpush1.msra.mxu0 %v96
  %120 = vmatprep.subr.mxu0 0.0
  %121 = vmatpush1.msra.mxu0 %v97
  %122 = vmatprep.subr.mxu0 0.0
  %123 = vmatpush1.msra.mxu0 %v98
  %124 = vmatprep.subr.mxu0 0.0
  %125 = vmatpush1.msra.mxu0 %v114
  %126 = vmatprep.subr.mxu0 0.0
  %127 = vmatpush1.msra.mxu0 0.0
  %128 = vmatprep.subr.mxu0 0.0
  %129 = vmatpush1.msra.mxu0 0.0
  %130 = vmatprep.subr.mxu0 0.0
  %131 = vmatpush1.msra.mxu0 0.0
  %132 = vmatprep.subr.mxu0 0.0
  %133 = vmatpush1.msra.mxu0 0.0
  %134 = vmatprep.subr.mxu0 0.0
  %135 = vmatpush1.msra.mxu0 0.0
  %136 = vmatprep.subr.mxu0 0.0
  %137 = vmatpush1.msra.mxu0 0.0
  %138 = vmatprep.subr.mxu0 0.0
  %139 = vmatpush1.msra.mxu0 0.0
  %140 = vmatprep.subr.mxu0 0.0
  %141 = vmatpush1.msra.mxu0 0.0
  %142 = vmatprep.subr.mxu0 0.0
  %143 = vmatpush1.msra.mxu0 0.0
  %144 = vmatprep.subr.mxu0 0.0
  %145 = vmatpush1.msra.mxu0 0.0
  %146 = vmatprep.subr.mxu0 0.0
  %147 = vmatpush1.msra.mxu0 0.0
  %148 = vmatprep.subr.mxu0 0.0
  %149 = vmatpush1.msra.mxu0 0.0
  %150 = vmatprep.subr.mxu0 0.0
  %151 = vmatpush1.msra.mxu0 0.0
  %152 = vmatprep.subr.mxu0 0.0
  %153 = vmatpush1.msra.mxu0 0.0
  %154 = vmatprep.subr.mxu0 0.0
  %155 = vmatpush1.msra.mxu0 0.0
  %156 = vmatprep.subr.mxu0 0.0
  %157 = vmatpush1.msra.mxu0 0.0
  %158 = vmatprep.subr.mxu0 0.0
  %159 = vmatpush1.msra.mxu0 0.0
  %160 = vmatprep.subr.mxu0 0.0
  %161 = vmatpush1.msra.mxu0 0.0
  %162 = vmatprep.subr.mxu0 0.0
  %163 = vmatpush1.msra.mxu0 0.0
  %164 = vmatprep.subr.mxu0 0.0
  %165 = vmatpush1.msra.mxu0 0.0
  %166 = vmatprep.subr.mxu0 0.0
  %167 = vmatpush1.msra.mxu0 0.0
  %168 = vmatprep.subr.mxu0 0.0
  %169 = vmatpush1.msra.mxu0 0.0
  %170 = vmatprep.subr.mxu0 0.0
  %171 = vmatpush1.msra.mxu0 0.0
  %172 = vmatprep.subr.mxu0 0.0
  %173 = vmatpush1.msra.mxu0 0.0
  %174 = vmatprep.subr.mxu0 0.0
  %175 = vmatpush1.msra.mxu0 0.0
  %176 = vmatprep.subr.mxu0 0.0
  %177 = vmatpush1.msra.mxu0 0.0
  %178 = vmatprep.subr.mxu0 0.0
  %179 = vmatpush1.msra.mxu0 0.0
  %180 = vmatprep.mubr.f32.mxu0 0.0
  %181 = vmatmul.mubr.f32.gmra.mrb[0].mxu0 %v110
  %v182 = vpop.f32.mrb[0].mxu0
  %v183 = vadd.f32 0.0, %v182
  %v184 = vpop.f32.mrb[0].mxu0
  %185 = vdwg.mxu0
  %v186 = vmul.f32 %v183, 0.055555556
  %v187 = vlaneseq
  %v188 = vshrl.u32 %v187, 7
  %v189 = vsub.s32 0, %v188
  %v190 = vrot.slane %v186, %v189
  %v191 = vsub.f32 %v92, %v190
  %v192 = vmul.f32 %v191, %v191
  %v193 = vsel %vm100, %v192, 0.0
  %v194 = vrot.slane %v193, 4
  %v195 = vadd.f32 %v193, %v194
  %v196 = vrot.slane %v195, 2
  %v197 = vadd.f32 %v195, %v196
  %v198 = vrot.slane %v197, 1
  %v199 = vadd.f32 %v197, %v198
  %v201 = vsel %vm108, %v199, 0
  %203 = vmatprep.subr.mxu0 0.0
  %204 = vmatpush1.msra.mxu0 %v95
  %205 = vmatprep.subr.mxu0 0.0
  %206 = vmatpush1.msra.mxu0 %v96
  %207 = vmatprep.subr.mxu0 0.0
  %208 = vmatpush1.msra.mxu0 %v97
  %209 = vmatprep.subr.mxu0 0.0
  %210 = vmatpush1.msra.mxu0 %v98
  %211 = vmatprep.subr.mxu0 0.0
  %212 = vmatpush1.msra.mxu0 %v114
  %213 = vmatprep.subr.mxu0 0.0
  %214 = vmatpush1.msra.mxu0 0.0
  %215 = vmatprep.subr.mxu0 0.0
  %216 = vmatpush1.msra.mxu0 0.0
  %217 = vmatprep.subr.mxu0 0.0
  %218 = vmatpush1.msra.mxu0 0.0
  %219 = vmatprep.subr.mxu0 0.0
  %220 = vmatpush1.msra.mxu0 0.0
  %221 = vmatprep.subr.mxu0 0.0
  %222 = vmatpush1.msra.mxu0 0.0
  %223 = vmatprep.subr.mxu0 0.0
  %224 = vmatpush1.msra.mxu0 0.0
  %225 = vmatprep.subr.mxu0 0.0
  %226 = vmatpush1.msra.mxu0 0.0
  %227 = vmatprep.subr.mxu0 0.0
  %228 = vmatpush1.msra.mxu0 0.0
  %229 = vmatprep.subr.mxu0 0.0
  %230 = vmatpush1.msra.mxu0 0.0
  %231 = vmatprep.subr.mxu0 0.0
  %232 = vmatpush1.msra.mxu0 0.0
  %233 = vmatprep.subr.mxu0 0.0
  %234 = vmatpush1.msra.mxu0 0.0
  %235 = vmatprep.subr.mxu0 0.0
  %236 = vmatpush1.msra.mxu0 0.0
  %237 = vmatprep.subr.mxu0 0.0
  %238 = vmatpush1.msra.mxu0 0.0
  %239 = vmatprep.subr.mxu0 0.0
  %240 = vmatpush1.msra.mxu0 0.0
  %241 = vmatprep.subr.mxu0 0.0
  %242 = vmatpush1.msra.mxu0 0.0
  %243 = vmatprep.subr.mxu0 0.0
  %244 = vmatpush1.msra.mxu0 0.0
  %245 = vmatprep.subr.mxu0 0.0
  %246 = vmatpush1.msra.mxu0 0.0
  %247 = vmatprep.subr.mxu0 0.0
  %248 = vmatpush1.msra.mxu0 0.0
  %249 = vmatprep.subr.mxu0 0.0
  %250 = vmatpush1.msra.mxu0 0.0
  %251 = vmatprep.subr.mxu0 0.0
  %252 = vmatpush1.msra.mxu0 0.0
  %253 = vmatprep.subr.mxu0 0.0
  %254 = vmatpush1.msra.mxu0 0.0
  %255 = vmatprep.subr.mxu0 0.0
  %256 = vmatpush1.msra.mxu0 0.0
  %257 = vmatprep.subr.mxu0 0.0
  %258 = vmatpush1.msra.mxu0 0.0
  %259 = vmatprep.subr.mxu0 0.0
  %260 = vmatpush1.msra.mxu0 0.0
  %261 = vmatprep.subr.mxu0 0.0
  %262 = vmatpush1.msra.mxu0 0.0
  %263 = vmatprep.subr.mxu0 0.0
  %264 = vmatpush1.msra.mxu0 0.0
  %265 = vmatprep.subr.mxu0 0.0
  %266 = vmatpush1.msra.mxu0 0.0
  %267 = vmatprep.mubr.f32.mxu0 0.0
  %268 = vmatmul.mubr.f32.gmra.mrb[0].mxu0 %v201
  %v269 = vpop.f32.mrb[0].mxu0
  %v270 = vadd.f32 0.0, %v269
  %v271 = vpop.f32.mrb[0].mxu0
  %272 = vdwg.mxu0
  %v273 = vmul.f32 %v270, 0.055555556
  %v274 = vld [vmem:[%s1 + $0xa0] sm:$0x1]
  %v275 = vld [vmem:[%s1 + $0xa1] sm:$0x1]
  %v276 = vadd.f32 %v273, 1e-05
  %v277 = vrsqrt.pop %v276
  %v278 = vmul.f32 %v274, %v277
  %v279 = vlaneseq
  %v280 = vshrl.u32 %v279, 7
  %v281 = vsub.s32 0, %v280
  %v282 = vrot.slane %v278, %v281
  %v283 = vmul.f32 %v191, %v282
  %v284 = vlaneseq
  %v285 = vshrl.u32 %v284, 7
  %v286 = vsub.s32 0, %v285
  %v287 = vrot.slane %v275, %v286
  %v288 = vadd.f32 %v283, %v287
  %v289 = vxor.u32 %v288, 2147483648
  %v290 = vmul.f32 %v289, 1.442695
  %v291 = vpow.pop %v290
  %v292 = vadd.f32 %v291, 1.0
  %v293 = vrcp.pop %v292
  %v294 = vmul.f32 1.0, %v293
  %v295 = vmul.f32 %v288, %v294
  %v296 = vld [vmem:[%s1 + $0x48] sm:$0xff]
  %v297 = vld [vmem:[%s1 + $0x50] sm:$0xff]
  %v298 = vld [vmem:[%s1 + $0x58] sm:$0xff]
  %v299 = vld [vmem:[%s1 + $0x60] sm:$0xff]
  %v300 = vld [vmem:[%s1 + $0x68] sm:$0xf]
  %v302 = vsel %vm108, %v295, 0
  %v305 = vsel %vm112, %v300, 0
  %307 = vmatprep.subr.mxu0 0.0
  %308 = vmatpush1.msra.mxu0 %v296
  %309 = vmatprep.subr.mxu0 0.0
  %310 = vmatpush1.msra.mxu0 %v297
  %311 = vmatprep.subr.mxu0 0.0
  %312 = vmatpush1.msra.mxu0 %v298
  %313 = vmatprep.subr.mxu0 0.0
  %314 = vmatpush1.msra.mxu0 %v299
  %315 = vmatprep.subr.mxu0 0.0
  %316 = vmatpush1.msra.mxu0 %v305
  %317 = vmatprep.subr.mxu0 0.0
  %318 = vmatpush1.msra.mxu0 0.0
  %319 = vmatprep.subr.mxu0 0.0
  %320 = vmatpush1.msra.mxu0 0.0
  %321 = vmatprep.subr.mxu0 0.0
  %322 = vmatpush1.msra.mxu0 0.0
  %323 = vmatprep.subr.mxu0 0.0
  %324 = vmatpush1.msra.mxu0 0.0
  %325 = vmatprep.subr.mxu0 0.0
  %326 = vmatpush1.msra.mxu0 0.0
  %327 = vmatprep.subr.mxu0 0.0
  %328 = vmatpush1.msra.mxu0 0.0
  %329 = vmatprep.subr.mxu0 0.0
  %330 = vmatpush1.msra.mxu0 0.0
  %331 = vmatprep.subr.mxu0 0.0
  %332 = vmatpush1.msra.mxu0 0.0
  %333 = vmatprep.subr.mxu0 0.0
  %334 = vmatpush1.msra.mxu0 0.0
  %335 = vmatprep.subr.mxu0 0.0
  %336 = vmatpush1.msra.mxu0 0.0
  %337 = vmatprep.subr.mxu0 0.0
  %338 = vmatpush1.msra.mxu0 0.0
  %339 = vmatprep.subr.mxu0 0.0
  %340 = vmatpush1.msra.mxu0 0.0
  %341 = vmatprep.subr.mxu0 0.0
  %342 = vmatpush1.msra.mxu0 0.0
  %343 = vmatprep.subr.mxu0 0.0
  %344 = vmatpush1.msra.mxu0 0.0
  %345 = vmatprep.subr.mxu0 0.0
  %346 = vmatpush1.msra.mxu0 0.0
  %347 = vmatprep.subr.mxu0 0.0
  %348 = vmatpush1.msra.mxu0 0.0
  %349 = vmatprep.subr.mxu0 0.0
  %350 = vmatpush1.msra.mxu0 0.0
  %351 = vmatprep.subr.mxu0 0.0
  %352 = vmatpush1.msra.mxu0 0.0
  %353 = vmatprep.subr.mxu0 0.0
  %354 = vmatpush1.msra.mxu0 0.0
  %355 = vmatprep.subr.mxu0 0.0
  %356 = vmatpush1.msra.mxu0 0.0
  %357 = vmatprep.subr.mxu0 0.0
  %358 = vmatpush1.msra.mxu0 0.0
  %359 = vmatprep.subr.mxu0 0.0
  %360 = vmatpush1.msra.mxu0 0.0
  %361 = vmatprep.subr.mxu0 0.0
  %362 = vmatpush1.msra.mxu0 0.0
  %363 = vmatprep.subr.mxu0 0.0
  %364 = vmatpush1.msra.mxu0 0.0
  %365 = vmatprep.subr.mxu0 0.0
  %366 = vmatpush1.msra.mxu0 0.0
  %367 = vmatprep.subr.mxu0 0.0
  %368 = vmatpush1.msra.mxu0 0.0
  %369 = vmatprep.subr.mxu0 0.0
  %370 = vmatpush1.msra.mxu0 0.0
  %371 = vmatprep.mubr.f32.mxu0 0.0
  %372 = vmatmul.mubr.f32.gmra.mrb[0].mxu0 %v302
  %v373 = vpop.f32.mrb[0].mxu0
  %v374 = vadd.f32 0.0, %v373
  %v375 = vpop.f32.mrb[0].mxu0
  %376 = vdwg.mxu0
  %vm377 = vcmask 58368
  %v378 = vsel %vm377, %v374, 0.0
  %v379 = vrot.slane %v378, 4
  %v380 = vadd.f32 %v378, %v379
  %v381 = vrot.slane %v380, 2
  %v382 = vadd.f32 %v380, %v381
  %v383 = vrot.slane %v382, 1
  %v384 = vadd.f32 %v382, %v383
  %v385 = vrcp.pop 2.0
  %v386 = vmul.f32 %v384, %v385
  %v387 = vsub.f32 %v374, %v386
  %v388 = vmul.f32 %v387, %v387
  %v389 = vsel %vm377, %v388, 0.0
  %v390 = vrot.slane %v389, 4
  %v391 = vadd.f32 %v389, %v390
  %v392 = vrot.slane %v391, 2
  %v393 = vadd.f32 %v391, %v392
  %v394 = vrot.slane %v393, 1
  %v395 = vadd.f32 %v393, %v394
  %v396 = vmul.f32 %v395, %v385
  %v397 = vld [vmem:[%s1 + $0xa2] sm:$0x1]
  %v398 = vld [vmem:[%s1 + $0xa3] sm:$0x1]
  %v399 = vadd.f32 %v396, 1e-05
  %v400 = vrsqrt.pop %v399
  %v401 = vmul.f32 %v397, %v400
  %v402 = vlaneseq
  %v403 = vshrl.u32 %v402, 7
  %v404 = vsub.s32 0, %v403
  %v405 = vrot.slane %v401, %v404
  %v406 = vmul.f32 %v387, %v405
  %v407 = vlaneseq
  %v408 = vshrl.u32 %v407, 7
  %v409 = vsub.s32 0, %v408
  %v410 = vrot.slane %v398, %v409
  %v411 = vadd.f32 %v406, %v410
  %v412 = vxor.u32 %v411, 2147483648
  %v413 = vmul.f32 %v412, 1.442695
  %v414 = vpow.pop %v413
  %v415 = vadd.f32 %v414, 1.0
  %v416 = vrcp.pop %v415
  %v417 = vmul.f32 1.0, %v416
  %v418 = vmul.f32 %v411, %v417
  %v419 = vld [vmem:[%s1 + $0x98] sm:$0xff]
  %vm420 = vcmask 64512
  %v422 = vsel %vm420, %v418, 0
  %424 = vmatprep.subr.mxu0 0.0
  %425 = vmatpush1.msra.mxu0 %v419
  %426 = vmatprep.subr.mxu0 0.0
  %427 = vmatpush1.msra.mxu0 0.0
  %428 = vmatprep.subr.mxu0 0.0
  %429 = vmatpush1.msra.mxu0 0.0
  %430 = vmatprep.subr.mxu0 0.0
  %431 = vmatpush1.msra.mxu0 0.0
  %432 = vmatprep.subr.mxu0 0.0
  %433 = vmatpush1.msra.mxu0 0.0
  %434 = vmatprep.subr.mxu0 0.0
  %435 = vmatpush1.msra.mxu0 0.0
  %436 = vmatprep.subr.mxu0 0.0
  %437 = vmatpush1.msra.mxu0 0.0
  %438 = vmatprep.subr.mxu0 0.0
  %439 = vmatpush1.msra.mxu0 0.0
  %440 = vmatprep.subr.mxu0 0.0
  %441 = vmatpush1.msra.mxu0 0.0
  %442 = vmatprep.subr.mxu0 0.0
  %443 = vmatpush1.msra.mxu0 0.0
  %444 = vmatprep.subr.mxu0 0.0
  %445 = vmatpush1.msra.mxu0 0.0
  %446 = vmatprep.subr.mxu0 0.0
  %447 = vmatpush1.msra.mxu0 0.0
  %448 = vmatprep.subr.mxu0 0.0
  %449 = vmatpush1.msra.mxu0 0.0
  %450 = vmatprep.subr.mxu0 0.0
  %451 = vmatpush1.msra.mxu0 0.0
  %452 = vmatprep.subr.mxu0 0.0
  %453 = vmatpush1.msra.mxu0 0.0
  %454 = vmatprep.subr.mxu0 0.0
  %455 = vmatpush1.msra.mxu0 0.0
  %456 = vmatprep.subr.mxu0 0.0
  %457 = vmatpush1.msra.mxu0 0.0
  %458 = vmatprep.subr.mxu0 0.0
  %459 = vmatpush1.msra.mxu0 0.0
  %460 = vmatprep.subr.mxu0 0.0
  %461 = vmatpush1.msra.mxu0 0.0
  %462 = vmatprep.subr.mxu0 0.0
  %463 = vmatpush1.msra.mxu0 0.0
  %464 = vmatprep.subr.mxu0 0.0
  %465 = vmatpush1.msra.mxu0 0.0
  %466 = vmatprep.subr.mxu0 0.0
  %467 = vmatpush1.msra.mxu0 0.0
  %468 = vmatprep.subr.mxu0 0.0
  %469 = vmatpush1.msra.mxu0 0.0
  %470 = vmatprep.subr.mxu0 0.0
  %471 = vmatpush1.msra.mxu0 0.0
  %472 = vmatprep.subr.mxu0 0.0
  %473 = vmatpush1.msra.mxu0 0.0
  %474 = vmatprep.subr.mxu0 0.0
  %475 = vmatpush1.msra.mxu0 0.0
  %476 = vmatprep.subr.mxu0 0.0
  %477 = vmatpush1.msra.mxu0 0.0
  %478 = vmatprep.subr.mxu0 0.0
  %479 = vmatpush1.msra.mxu0 0.0
  %480 = vmatprep.subr.mxu0 0.0
  %481 = vmatpush1.msra.mxu0 0.0
  %482 = vmatprep.subr.mxu0 0.0
  %483 = vmatpush1.msra.mxu0 0.0
  %484 = vmatprep.subr.mxu0 0.0
  %485 = vmatpush1.msra.mxu0 0.0
  %486 = vmatprep.subr.mxu0 0.0
  %487 = vmatpush1.msra.mxu0 0.0
  %488 = vmatprep.mubr.f32.mxu0 0.0
  %489 = vmatmul.mubr.f32.gmra.mrb[0].mxu0 %v422
  %v490 = vpop.f32.mrb[0].mxu0
  %v491 = vadd.f32 0.0, %v490
  %v492 = vpop.f32.mrb[0].mxu0
  %493 = vdwg.mxu0
  %v494 = vadd.f32 %v11, %v491
  %vm495 = vcmask 582656
  %496 = vst.msk [vmem:[%s2] sm:$0x3] %vm495, %v494
  // Predicated region
  $region10: #{forward.1} parent=0 // pred_check
    _
  $region11: #{forward.1} parent=0 // pred_check_branch
    %498 = sbr.rel (0) target = $region13
  $region12: #{forward.1} parent=0 // pred_region
    _
  $region13: #{forward.1} parent=0 // pred_fallthru
    _
  // Predicated region
  $region14: #{forward.1} parent=0 // pred_check
    _
  $region15: #{forward.1} parent=0 // pred_check_branch
    %500 = sbr.rel (0) target = $region17
  $region16: #{forward.1} parent=0 // pred_region
    _
  $region17: #{forward.1} parent=0 // pred_fallthru
    _

</llo_original>
